<compile_context>
chip_gen: v6e
topology: v6e:2x2x1
jax: 0.10.0
libtpu: 0.0.40
codegen_flags: <defaults>
</compile_context>

<pallas_src>
import jax
import jax.numpy as jnp
from jax.experimental import pallas as pl
from jax.experimental.pallas import tpu as pltpu

MIB = 1024 * 1024


def _round_up(x: int, m: int) -> int:
    return (x + m - 1) // m * m


def _vmem_capacity_bytes() -> int:
    """Physical VMEM per TensorCore; conservative 64 MiB if the query fails."""
    try:
        info = pltpu.get_tpu_info()
        for attr in ("vmem_capacity_bytes", "vmem_bytes", "vmem_size_bytes"):
            v = getattr(info, attr, None)
            if v:
                return int(v)
    except Exception:
        pass
    return 64 * MIB


# --------------------------- kernels ---------------------------------------


def _resident_kernel(x_ref, w1_ref, b1_ref, w2_ref, b2_ref, w3_ref, b3_ref,
                     o_ref):
    """Full weights resident in VMEM: one token tile per grid step."""
    x = x_ref[...]                                              # native dtype
    x1 = jnp.dot(x, w1_ref[...], preferred_element_type=jnp.float32) + b1_ref[...]
    x2 = jnp.dot(x, w2_ref[...], preferred_element_type=jnp.float32) + b2_ref[...]
    hidden = (x1 * jax.nn.sigmoid(x1)) * x2                     # f32 gate math
    hidden = hidden.astype(x_ref.dtype)                         # back to MXU dtype
    out = jnp.dot(hidden, w3_ref[...], preferred_element_type=jnp.float32) + b3_ref[...]
    o_ref[...] = (x.astype(jnp.float32) + out).astype(o_ref.dtype)


def _htiled_kernel(x_ref, w1_ref, b1_ref, w2_ref, b2_ref, w3_ref, b3_ref,
                   o_ref, acc_ref):
    """H-tiled reduction: weights stream in (C, tH)/(tH, C) tiles, f32 acc."""
    h = pl.program_id(1)

    @pl.when(h == 0)
    def _():
        acc_ref[...] = jnp.zeros_like(acc_ref)

    x = x_ref[...]
    x1 = jnp.dot(x, w1_ref[...], preferred_element_type=jnp.float32) + b1_ref[...]
    x2 = jnp.dot(x, w2_ref[...], preferred_element_type=jnp.float32) + b2_ref[...]
    hidden = (x1 * jax.nn.sigmoid(x1)) * x2
    hidden = hidden.astype(x_ref.dtype)
    acc_ref[...] += jnp.dot(hidden, w3_ref[...], preferred_element_type=jnp.float32)

    @pl.when(h == pl.num_programs(1) - 1)
    def _():
        # NOTE: residual reads x_ref (never o_ref), so masked partial output
        # blocks stay correct.
        o_ref[...] = (x.astype(jnp.float32) + acc_ref[...] + b3_ref[...]
                      ).astype(o_ref.dtype)


# --------------------------- wrapper ----------------------------------------


def swiglu_ffn(x, w12, b12, w3, b3, *, tile_m=None, tile_h=None,
               vmem_limit_bytes=None, force_h_tiling=False):
    """SwiGLU FFN forward.

    x:   (B, N, C) tokens (channels_last, like the PyTorch module).
    w12: (C, 2H)  pre-transposed weight of nn.Linear(C, 2H)   (i.e. W12.T)
    b12: (2H,)
    w3:  (H, C)   pre-transposed weight of nn.Linear(H, C)    (i.e. W3.T)
    b3:  (C,)
    """
    B, N, C = x.shape
    two_h = w12.shape[1]
    H = two_h // 2
    assert w12.shape == (C, two_h) and w3.shape == (H, C)
    assert b12.shape == (two_h,) and b3.shape == (C,)

    # One-time wrapper cast: matmul operands share the activation dtype so the
    # kernel never promotes weights per grid step.
    w12 = w12.astype(x.dtype)
    w3 = w3.astype(x.dtype)

    # Split W12/b12 once (matches torch.chunk(x12, 2, dim=-1)).
    w1 = w12[:, :H]
    w2 = w12[:, H:]
    b1 = b12[:H].reshape(1, H).astype(jnp.float32)
    b2 = b12[H:].reshape(1, H).astype(jnp.float32)
    b3_2d = b3.reshape(1, C).astype(jnp.float32)

    M = B * N
    x2d = x.reshape(M, C)
    x_bytes = x.dtype.itemsize
    w_bytes = w1.dtype.itemsize

    # ---- generation-aware VMEM limit / tile_m ----
    vmem_cap = _vmem_capacity_bytes()
    if vmem_limit_bytes is None:
        vmem_limit_bytes = int(max(32 * MIB,
                                   min(vmem_cap * 0.85, vmem_cap - 12 * MIB)))
    budget = int(vmem_limit_bytes * 0.8)
    if tile_m is None:
        tile_m = 512 if vmem_cap >= 128 * MIB else 256

    # ---- token tile (rows): dtype-packed, >=2 tiles for megacore when possible
    packing = {2: 16, 1: 32}.get(x_bytes, 8)
    tm = min(tile_m, _round_up(M, packing))
    if tm >= M:
        tm = M                                   # full-extent block is legal
        if M > 128:
            tm = _round_up(pl.cdiv(M, 2), packing)   # >=2 tiles for 2 TCs (v7x)
    grid_m = pl.cdiv(M, tm)

    # ---- choose resident vs H-tiled path ----
    resident_vmem = (
        3 * C * H * w_bytes              # W1/W2/W3 single-buffered
        + 2 * 2 * tm * C * x_bytes       # x + out tiles, double-buffered
        + (2 * H + C) * 4                # biases (f32)
        + 3 * tm * H * 4                 # f32 x1/x2/hidden temps (approx)
        + tm * C * 4                     # f32 residual/out temp
    )
    use_h_tiling = bool(force_h_tiling) or resident_vmem > budget

    th = H
    H_pad = H
    if use_h_tiling:
        if tile_h is None:
            tile_h = 128
            for cand in (2048, 1024, 512, 256, 128):
                if cand > H:
                    continue
                step_vmem = (
                    2 * 3 * C * cand * w_bytes    # streamed W tiles (2 buffers)
                    + 2 * 2 * cand * 4            # streamed b1/b2 tiles
                    + 2 * 2 * tm * C * x_bytes    # x + out tiles
                    + 3 * tm * cand * 4           # f32 gate temps
                    + tm * C * 4 + C * 4          # f32 accumulator + b3
                )
                if step_vmem <= budget:
                    tile_h = cand
                    break
        th = min(tile_h, H)
        if H >= 128:
            th = max(128, (th // 128) * 128)      # lane-aligned H tile
        H_pad = _round_up(H, th)
        if H_pad != H:
            # Zero-padding W1/W2 columns, b1/b2 and W3 rows contributes exactly 0.
            w1 = jnp.pad(w1, ((0, 0), (0, H_pad - H)))
            w2 = jnp.pad(w2, ((0, 0), (0, H_pad - H)))
            b1 = jnp.pad(b1, ((0, 0), (0, H_pad - H)))
            b2 = jnp.pad(b2, ((0, 0), (0, H_pad - H)))
            w3 = jnp.pad(w3, ((0, H_pad - H), (0, 0)))

    cost = pl.CostEstimate(
        flops=6 * M * C * H,                       # 2*M*C*2H + 2*M*H*C
        transcendentals=M * H,                     # sigmoid
        bytes_accessed=(2 * M * C * x_bytes
                        + 3 * C * H_pad * w_bytes * (grid_m if use_h_tiling else 1)
                        + (2 * H_pad + C) * 4),
    )

    def _build(single_buffer: bool):
        def const_spec(shape):
            idx = lambda *_: (0,) * len(shape)
            if single_buffer:
                return pl.BlockSpec(shape, idx, pipeline_mode=pl.Buffered(1))
            return pl.BlockSpec(shape, idx)

        if not use_h_tiling:
            grid = (grid_m,)
            in_specs = [
                pl.BlockSpec((tm, C), lambda i: (i, 0)),   # x tile
                const_spec((C, H)),                        # W1 (resident, 1 buffer)
                const_spec((1, H)),                        # b1
                const_spec((C, H)),                        # W2
                const_spec((1, H)),                        # b2
                const_spec((H, C)),                        # W3
                const_spec((1, C)),                        # b3
            ]
            out_specs = pl.BlockSpec((tm, C), lambda i: (i, 0))
            scratch = []
            kernel = _resident_kernel
            semantics = ("parallel",)
        else:
            grid = (grid_m, H_pad // th)
            in_specs = [
                pl.BlockSpec((tm, C), lambda i, h: (i, 0)),   # x (constant over h)
                pl.BlockSpec((C, th), lambda i, h: (0, h)),   # W1 tile (streams)
                pl.BlockSpec((1, th), lambda i, h: (0, h)),   # b1 tile
                pl.BlockSpec((C, th), lambda i, h: (0, h)),   # W2 tile
                pl.BlockSpec((1, th), lambda i, h: (0, h)),   # b2 tile
                pl.BlockSpec((th, C), lambda i, h: (h, 0)),   # W3 tile
                const_spec((1, C)),                           # b3 (resident)
            ]
            out_specs = pl.BlockSpec((tm, C), lambda i, h: (i, 0))
            scratch = [pltpu.VMEM((tm, C), jnp.float32)]      # f32 accumulator
            kernel = _htiled_kernel
            semantics = ("parallel", "arbitrary")

        return pl.pallas_call(
            kernel,
            out_shape=jax.ShapeDtypeStruct((M, C), x.dtype),
            grid_spec=pltpu.PrefetchScalarGridSpec(
                num_scalar_prefetch=0,
                grid=grid,
                in_specs=in_specs,
                out_specs=out_specs,
                scratch_shapes=scratch,
            ),
            compiler_params=pltpu.CompilerParams(
                dimension_semantics=semantics,
                vmem_limit_bytes=vmem_limit_bytes,
            ),
            cost_estimate=cost,
        )

    try:
        out2d = _build(single_buffer=True)(x2d, w1, b1, w2, b2, w3, b3_2d)
    except Exception:
        # pipeline_mode=pl.Buffered(1) unsupported on this JAX build -> default
        # double-buffered specs (correctness identical).
        out2d = _build(single_buffer=False)(x2d, w1, b1, w2, b2, w3, b3_2d)

    return out2d.reshape(B, N, C)


# --------------------------- reference & test --------------------------------


def reference_swiglu_ffn(x, w12, b12, w3, b3):
    """Pure-JAX f32 reference (same math as the PyTorch module)."""
    xf = x.astype(jnp.float32)
    x12 = jnp.einsum("bnc,ch->bnh", xf, w12.astype(jnp.float32)) + b12.astype(jnp.float32)
    h = x12.shape[-1] // 2
    x1, x2 = x12[..., :h], x12[..., h:]
    hidden = jax.nn.silu(x1) * x2
    out = jnp.einsum("bnh,hc->bnc", hidden, w3.astype(jnp.float32)) + b3.astype(jnp.float32)
    return xf + out


if __name__ == "__main__":
    key = jax.random.PRNGKey(0)

    # --- test 1: resident-weight path, bf16, small ViT-like shapes -----------
    B, N, C, H = 2, 8, 32, 64
    k = jax.random.split(key, 5)
    dtype = jnp.bfloat16
    x = jax.random.normal(k[0], (B, N, C), dtype=jnp.float32).astype(dtype)
    w12 = (jax.random.normal(k[1], (C, 2 * H), dtype=jnp.float32) * 0.02).astype(dtype)
    b12 = jax.random.normal(k[2], (2 * H,), dtype=jnp.float32) * 0.02
    w3 = (jax.random.normal(k[3], (H, C), dtype=jnp.float32) * 0.02).astype(dtype)
    b3 = jax.random.normal(k[4], (C,), dtype=jnp.float32) * 0.02

    y = jax.block_until_ready(swiglu_ffn(x, w12, b12, w3, b3))
    y_ref = reference_swiglu_ffn(x, w12, b12, w3, b3)
    assert y.shape == (B, N, C)
    err = float(jnp.max(jnp.abs(y.astype(jnp.float32) - y_ref)))
    assert err < 5e-2, f"resident path mismatch: max abs err = {err}"

    # --- test 2: forced H-tiled reduction path, f32, ragged token count ------
    B2, N2, C2, H2 = 2, 13, 32, 256        # M=26 -> partial last M tile
    k2 = jax.random.split(jax.random.PRNGKey(1), 5)
    x2 = jax.random.normal(k2[0], (B2, N2, C2), dtype=jnp.float32)
    w12_2 = jax.random.normal(k2[1], (C2, 2 * H2), dtype=jnp.float32) * 0.02
    b12_2 = jax.random.normal(k2[2], (2 * H2,), dtype=jnp.float32) * 0.02
    w3_2 = jax.random.normal(k2[3], (H2, C2), dtype=jnp.float32) * 0.02
    b3_2 = jax.random.normal(k2[4], (C2,), dtype=jnp.float32) * 0.02

    y2 = jax.block_until_ready(
        swiglu_ffn(x2, w12_2, b12_2, w3_2, b3_2,
                   tile_m=16, tile_h=128, force_h_tiling=True))
    y2_ref = reference_swiglu_ffn(x2, w12_2, b12_2, w3_2, b3_2)
    err2 = float(jnp.max(jnp.abs(y2.astype(jnp.float32) - y2_ref)))
    assert y2.shape == (B2, N2, C2)
    assert err2 < 1e-3, f"H-tiled path mismatch: max abs err = {err2}"

    print("KERNEL_OK")
</pallas_src>

<mosaic_0001>
module attributes {stable_mosaic.version = 11 : i64} {
  func.func @_resident_kernel(%arg0: i32, %arg1: memref<16x32xbf16, #tpu.memory_space<vmem>>, %arg2: memref<32x64xbf16, #tpu.memory_space<vmem>>, %arg3: memref<1x64xf32, #tpu.memory_space<vmem>>, %arg4: memref<32x64xbf16, #tpu.memory_space<vmem>>, %arg5: memref<1x64xf32, #tpu.memory_space<vmem>>, %arg6: memref<64x32xbf16, #tpu.memory_space<vmem>>, %arg7: memref<1x32xf32, #tpu.memory_space<vmem>>, %arg8: memref<16x32xbf16, #tpu.memory_space<vmem>>) attributes {dimension_semantics = [#tpu.dimension_semantics<parallel>], iteration_bounds = array<i64: 1>, scalar_prefetch = 0 : i64, scratch_operands = 0 : i64, tpu.core_type = #tpu.core_type<tc>, window_params = [{transform_indices = @transform_0, window_bounds = array<i64: 16, 32>}, {pipeline_mode = #tpu.pipeline_mode<synchronous>, transform_indices = @transform_1, window_bounds = array<i64: 32, 64>}, {pipeline_mode = #tpu.pipeline_mode<synchronous>, transform_indices = @transform_2, window_bounds = array<i64: 1, 64>}, {pipeline_mode = #tpu.pipeline_mode<synchronous>, transform_indices = @transform_3, window_bounds = array<i64: 32, 64>}, {pipeline_mode = #tpu.pipeline_mode<synchronous>, transform_indices = @transform_4, window_bounds = array<i64: 1, 64>}, {pipeline_mode = #tpu.pipeline_mode<synchronous>, transform_indices = @transform_5, window_bounds = array<i64: 64, 32>}, {pipeline_mode = #tpu.pipeline_mode<synchronous>, transform_indices = @transform_6, window_bounds = array<i64: 1, 32>}, {transform_indices = @transform_7, window_bounds = array<i64: 16, 32>}]} {
    %c0 = arith.constant 0 : index
    %c0_0 = arith.constant 0 : index
    %0 = vector.load %arg1[%c0, %c0_0] : memref<16x32xbf16, #tpu.memory_space<vmem>>, vector<16x32xbf16>
    %c0_1 = arith.constant 0 : index
    %c0_2 = arith.constant 0 : index
    %1 = vector.load %arg2[%c0_1, %c0_2] : memref<32x64xbf16, #tpu.memory_space<vmem>>, vector<32x64xbf16>
    %cst = arith.constant dense<0.000000e+00> : vector<16x64xf32>
    %2 = tpu.matmul %0, %1, %cst {dimension_numbers = #tpu.dot_dimension_numbers<[1], [0], [0], [1], [0, 0, 1, 1], [], []>} : vector<16x32xbf16>, vector<32x64xbf16>, vector<16x64xf32> -> vector<16x64xf32>
    %c0_3 = arith.constant 0 : index
    %c0_4 = arith.constant 0 : index
    %3 = vector.load %arg3[%c0_3, %c0_4] : memref<1x64xf32, #tpu.memory_space<vmem>>, vector<1x64xf32>
    %4 = vector.broadcast %3 : vector<1x64xf32> to vector<16x64xf32>
    %5 = arith.addf %2, %4 : vector<16x64xf32>
    %c0_5 = arith.constant 0 : index
    %c0_6 = arith.constant 0 : index
    %6 = vector.load %arg4[%c0_5, %c0_6] : memref<32x64xbf16, #tpu.memory_space<vmem>>, vector<32x64xbf16>
    %cst_7 = arith.constant dense<0.000000e+00> : vector<16x64xf32>
    %7 = tpu.matmul %0, %6, %cst_7 {dimension_numbers = #tpu.dot_dimension_numbers<[1], [0], [0], [1], [0, 0, 1, 1], [], []>} : vector<16x32xbf16>, vector<32x64xbf16>, vector<16x64xf32> -> vector<16x64xf32>
    %c0_8 = arith.constant 0 : index
    %c0_9 = arith.constant 0 : index
    %8 = vector.load %arg5[%c0_8, %c0_9] : memref<1x64xf32, #tpu.memory_space<vmem>>, vector<1x64xf32>
    %9 = vector.broadcast %8 : vector<1x64xf32> to vector<16x64xf32>
    %10 = arith.addf %7, %9 : vector<16x64xf32>
    %11 = arith.negf %5 : vector<16x64xf32>
    %12 = math.exp %11 : vector<16x64xf32>
    %cst_10 = arith.constant 1.000000e+00 : f32
    %13 = vector.broadcast %cst_10 : f32 to vector<16x64xf32>
    %14 = arith.addf %13, %12 : vector<16x64xf32>
    %15 = arith.divf %13, %14 : vector<16x64xf32>
    %16 = arith.mulf %5, %15 : vector<16x64xf32>
    %17 = arith.mulf %16, %10 : vector<16x64xf32>
    %18 = arith.truncf %17 : vector<16x64xf32> to vector<16x64xbf16>
    %c0_11 = arith.constant 0 : index
    %c0_12 = arith.constant 0 : index
    %19 = vector.load %arg6[%c0_11, %c0_12] : memref<64x32xbf16, #tpu.memory_space<vmem>>, vector<64x32xbf16>
    %cst_13 = arith.constant dense<0.000000e+00> : vector<16x32xf32>
    %20 = tpu.matmul %18, %19, %cst_13 {dimension_numbers = #tpu.dot_dimension_numbers<[1], [0], [0], [1], [0, 0, 1, 1], [], []>} : vector<16x64xbf16>, vector<64x32xbf16>, vector<16x32xf32> -> vector<16x32xf32>
    %c0_14 = arith.constant 0 : index
    %c0_15 = arith.constant 0 : index
    %21 = vector.load %arg7[%c0_14, %c0_15] : memref<1x32xf32, #tpu.memory_space<vmem>>, vector<1x32xf32>
    %22 = vector.broadcast %21 : vector<1x32xf32> to vector<16x32xf32>
    %23 = arith.addf %20, %22 : vector<16x32xf32>
    %24 = arith.extf %0 : vector<16x32xbf16> to vector<16x32xf32>
    %25 = arith.addf %24, %23 : vector<16x32xf32>
    %26 = arith.truncf %25 : vector<16x32xf32> to vector<16x32xbf16>
    %c0_16 = arith.constant 0 : index
    %c0_17 = arith.constant 0 : index
    %27 = vector.load %arg8[%c0_16, %c0_17] : memref<16x32xbf16, #tpu.memory_space<vmem>>, vector<16x32xbf16>
    tpu.vector_store %arg8[%c0_16, %c0_17], %26 {strides = array<i32>} : memref<16x32xbf16, #tpu.memory_space<vmem>>, vector<16x32xbf16>,
    return
  }
  func.func @transform_0(%arg0: i32) -> (i32, i32) {
    %c0_i32 = arith.constant 0 : i32
    %c0_i32_0 = arith.constant 0 : i32
    return %arg0, %c0_i32 : i32, i32
  }
  func.func @transform_1(%arg0: i32) -> (i32, i32) {
    %c0_i32 = arith.constant 0 : i32
    %c0_i32_0 = arith.constant 0 : i32
    %c0_i32_1 = arith.constant 0 : i32
    return %c0_i32, %c0_i32_0 : i32, i32
  }
  func.func @transform_2(%arg0: i32) -> (i32, i32) {
    %c0_i32 = arith.constant 0 : i32
    %c0_i32_0 = arith.constant 0 : i32
    %c0_i32_1 = arith.constant 0 : i32
    return %c0_i32, %c0_i32_0 : i32, i32
  }
  func.func @transform_3(%arg0: i32) -> (i32, i32) {
    %c0_i32 = arith.constant 0 : i32
    %c0_i32_0 = arith.constant 0 : i32
    %c0_i32_1 = arith.constant 0 : i32
    return %c0_i32, %c0_i32_0 : i32, i32
  }
  func.func @transform_4(%arg0: i32) -> (i32, i32) {
    %c0_i32 = arith.constant 0 : i32
    %c0_i32_0 = arith.constant 0 : i32
    %c0_i32_1 = arith.constant 0 : i32
    return %c0_i32, %c0_i32_0 : i32, i32
  }
  func.func @transform_5(%arg0: i32) -> (i32, i32) {
    %c0_i32 = arith.constant 0 : i32
    %c0_i32_0 = arith.constant 0 : i32
    %c0_i32_1 = arith.constant 0 : i32
    return %c0_i32, %c0_i32_0 : i32, i32
  }
  func.func @transform_6(%arg0: i32) -> (i32, i32) {
    %c0_i32 = arith.constant 0 : i32
    %c0_i32_0 = arith.constant 0 : i32
    %c0_i32_1 = arith.constant 0 : i32
    return %c0_i32, %c0_i32_0 : i32, i32
  }
  func.func @transform_7(%arg0: i32) -> (i32, i32) {
    %c0_i32 = arith.constant 0 : i32
    %c0_i32_0 = arith.constant 0 : i32
    return %arg0, %c0_i32 : i32, i32
  }
}

module attributes {stable_mosaic.version = 11 : i64} {
  func.func @_resident_kernel(%arg0: i32, %arg1: memref<16x32xbf16, #tpu.memory_space<vmem>>, %arg2: memref<32x64xbf16, #tpu.memory_space<vmem>>, %arg3: memref<1x64xf32, #tpu.memory_space<vmem>>, %arg4: memref<32x64xbf16, #tpu.memory_space<vmem>>, %arg5: memref<1x64xf32, #tpu.memory_space<vmem>>, %arg6: memref<64x32xbf16, #tpu.memory_space<vmem>>, %arg7: memref<1x32xf32, #tpu.memory_space<vmem>>, %arg8: memref<16x32xbf16, #tpu.memory_space<vmem>>) attributes {dimension_semantics = [#tpu.dimension_semantics<parallel>], iteration_bounds = array<i64: 1>, scalar_prefetch = 0 : i64, scratch_operands = 0 : i64, tpu.core_type = #tpu.core_type<tc>, window_params = [{transform_indices = @transform_0, window_bounds = array<i64: 16, 32>}, {pipeline_mode = #tpu.pipeline_mode<synchronous>, transform_indices = @transform_1, window_bounds = array<i64: 32, 64>}, {pipeline_mode = #tpu.pipeline_mode<synchronous>, transform_indices = @transform_2, window_bounds = array<i64: 1, 64>}, {pipeline_mode = #tpu.pipeline_mode<synchronous>, transform_indices = @transform_3, window_bounds = array<i64: 32, 64>}, {pipeline_mode = #tpu.pipeline_mode<synchronous>, transform_indices = @transform_4, window_bounds = array<i64: 1, 64>}, {pipeline_mode = #tpu.pipeline_mode<synchronous>, transform_indices = @transform_5, window_bounds = array<i64: 64, 32>}, {pipeline_mode = #tpu.pipeline_mode<synchronous>, transform_indices = @transform_6, window_bounds = array<i64: 1, 32>}, {transform_indices = @transform_7, window_bounds = array<i64: 16, 32>}]} {
    %c0 = arith.constant 0 : index
    %c0_0 = arith.constant 0 : index
    %0 = vector.load %arg1[%c0, %c0_0] : memref<16x32xbf16, #tpu.memory_space<vmem>>, vector<16x32xbf16>
    %c0_1 = arith.constant 0 : index
    %c0_2 = arith.constant 0 : index
    %1 = vector.load %arg2[%c0_1, %c0_2] : memref<32x64xbf16, #tpu.memory_space<vmem>>, vector<32x64xbf16>
    %cst = arith.constant dense<0.000000e+00> : vector<16x64xf32>
    %2 = tpu.matmul %0, %1, %cst {dimension_numbers = #tpu.dot_dimension_numbers<[1], [0], [0], [1], [0, 0, 1, 1], [], []>} : vector<16x32xbf16>, vector<32x64xbf16>, vector<16x64xf32> -> vector<16x64xf32>
    %c0_3 = arith.constant 0 : index
    %c0_4 = arith.constant 0 : index
    %3 = vector.load %arg3[%c0_3, %c0_4] : memref<1x64xf32, #tpu.memory_space<vmem>>, vector<1x64xf32>
    %4 = vector.broadcast %3 : vector<1x64xf32> to vector<16x64xf32>
    %5 = arith.addf %2, %4 : vector<16x64xf32>
    %c0_5 = arith.constant 0 : index
    %c0_6 = arith.constant 0 : index
    %6 = vector.load %arg4[%c0_5, %c0_6] : memref<32x64xbf16, #tpu.memory_space<vmem>>, vector<32x64xbf16>
    %cst_7 = arith.constant dense<0.000000e+00> : vector<16x64xf32>
    %7 = tpu.matmul %0, %6, %cst_7 {dimension_numbers = #tpu.dot_dimension_numbers<[1], [0], [0], [1], [0, 0, 1, 1], [], []>} : vector<16x32xbf16>, vector<32x64xbf16>, vector<16x64xf32> -> vector<16x64xf32>
    %c0_8 = arith.constant 0 : index
    %c0_9 = arith.constant 0 : index
    %8 = vector.load %arg5[%c0_8, %c0_9] : memref<1x64xf32, #tpu.memory_space<vmem>>, vector<1x64xf32>
    %9 = vector.broadcast %8 : vector<1x64xf32> to vector<16x64xf32>
    %10 = arith.addf %7, %9 : vector<16x64xf32>
    %11 = arith.negf %5 : vector<16x64xf32>
    %12 = math.exp %11 : vector<16x64xf32>
    %cst_10 = arith.constant 1.000000e+00 : f32
    %13 = vector.broadcast %cst_10 : f32 to vector<16x64xf32>
    %14 = arith.addf %13, %12 : vector<16x64xf32>
    %15 = arith.divf %13, %14 : vector<16x64xf32>
    %16 = arith.mulf %5, %15 : vector<16x64xf32>
    %17 = arith.mulf %16, %10 : vector<16x64xf32>
    %18 = arith.truncf %17 : vector<16x64xf32> to vector<16x64xbf16>
    %c0_11 = arith.constant 0 : index
    %c0_12 = arith.constant 0 : index
    %19 = vector.load %arg6[%c0_11, %c0_12] : memref<64x32xbf16, #tpu.memory_space<vmem>>, vector<64x32xbf16>
    %cst_13 = arith.constant dense<0.000000e+00> : vector<16x32xf32>
    %20 = tpu.matmul %18, %19, %cst_13 {dimension_numbers = #tpu.dot_dimension_numbers<[1], [0], [0], [1], [0, 0, 1, 1], [], []>} : vector<16x64xbf16>, vector<64x32xbf16>, vector<16x32xf32> -> vector<16x32xf32>
    %c0_14 = arith.constant 0 : index
    %c0_15 = arith.constant 0 : index
    %21 = vector.load %arg7[%c0_14, %c0_15] : memref<1x32xf32, #tpu.memory_space<vmem>>, vector<1x32xf32>
    %22 = vector.broadcast %21 : vector<1x32xf32> to vector<16x32xf32>
    %23 = arith.addf %20, %22 : vector<16x32xf32>
    %24 = arith.extf %0 : vector<16x32xbf16> to vector<16x32xf32>
    %25 = arith.addf %24, %23 : vector<16x32xf32>
    %26 = arith.truncf %25 : vector<16x32xf32> to vector<16x32xbf16>
    %c0_16 = arith.constant 0 : index
    %c0_17 = arith.constant 0 : index
    %27 = vector.load %arg8[%c0_16, %c0_17] : memref<16x32xbf16, #tpu.memory_space<vmem>>, vector<16x32xbf16>
    tpu.vector_store %arg8[%c0_16, %c0_17], %26 {strides = array<i32>} : memref<16x32xbf16, #tpu.memory_space<vmem>>, vector<16x32xbf16>,
    return
  }
  func.func @transform_0(%arg0: i32) -> (i32, i32) {
    %c0_i32 = arith.constant 0 : i32
    %c0_i32_0 = arith.constant 0 : i32
    return %arg0, %c0_i32 : i32, i32
  }
  func.func @transform_1(%arg0: i32) -> (i32, i32) {
    %c0_i32 = arith.constant 0 : i32
    %c0_i32_0 = arith.constant 0 : i32
    %c0_i32_1 = arith.constant 0 : i32
    return %c0_i32, %c0_i32_0 : i32, i32
  }
  func.func @transform_2(%arg0: i32) -> (i32, i32) {
    %c0_i32 = arith.constant 0 : i32
    %c0_i32_0 = arith.constant 0 : i32
    %c0_i32_1 = arith.constant 0 : i32
    return %c0_i32, %c0_i32_0 : i32, i32
  }
  func.func @transform_3(%arg0: i32) -> (i32, i32) {
    %c0_i32 = arith.constant 0 : i32
    %c0_i32_0 = arith.constant 0 : i32
    %c0_i32_1 = arith.constant 0 : i32
    return %c0_i32, %c0_i32_0 : i32, i32
  }
  func.func @transform_4(%arg0: i32) -> (i32, i32) {
    %c0_i32 = arith.constant 0 : i32
    %c0_i32_0 = arith.constant 0 : i32
    %c0_i32_1 = arith.constant 0 : i32
    return %c0_i32, %c0_i32_0 : i32, i32
  }
  func.func @transform_5(%arg0: i32) -> (i32, i32) {
    %c0_i32 = arith.constant 0 : i32
    %c0_i32_0 = arith.constant 0 : i32
    %c0_i32_1 = arith.constant 0 : i32
    return %c0_i32, %c0_i32_0 : i32, i32
  }
  func.func @transform_6(%arg0: i32) -> (i32, i32) {
    %c0_i32 = arith.constant 0 : i32
    %c0_i32_0 = arith.constant 0 : i32
    %c0_i32_1 = arith.constant 0 : i32
    return %c0_i32, %c0_i32_0 : i32, i32
  }
  func.func @transform_7(%arg0: i32) -> (i32, i32) {
    %c0_i32 = arith.constant 0 : i32
    %c0_i32_0 = arith.constant 0 : i32
    return %arg0, %c0_i32 : i32, i32
  }
}

</mosaic_0001>

<llo_original>
// kernel: tpu_custom_call.1
$region0: #{tpu_custom_call.1}
  #allocation0 [shape = 'u32[]', space=smem, size = 0x4, offset = 0x4, fixed_abs, tag = 'smem constant byte address 0x4 - core index']
  #allocation1 [shape = 'u32[144,128]{1,0:T(1,128)}', space=vmem, size = 0x12000, scoped, tag = 'internal scratch']
  %s0 = inlined_call_operand.vmem [shape: bf16[16,32], index: 0, kind: input, shape index: {}]
  %s1 = inlined_call_operand.vmem [shape: bf16[32,64], index: 1, kind: input, shape index: {}]
  %s2 = inlined_call_operand.vmem [shape: f32[1,64], index: 2, kind: input, shape index: {}]
  %s3 = inlined_call_operand.vmem [shape: bf16[32,64], index: 3, kind: input, shape index: {}]
  %s4 = inlined_call_operand.vmem [shape: f32[1,64], index: 4, kind: input, shape index: {}]
  %s5 = inlined_call_operand.vmem [shape: bf16[64,32], index: 5, kind: input, shape index: {}]
  %s6 = inlined_call_operand.vmem [shape: f32[1,32], index: 6, kind: input, shape index: {}]
  %s7 = inlined_call_operand.hbm [shape: bf16[16,32], index: 7, kind: output, shape index: {}]
  %s8 = sld [smem:[#allocation0]]
  $region38: #{tpu_custom_call.1} parent=0
    _
  %s10 = ssub.s32 1, %s8
  %s11 = scalar_select 0, %s10, %s8
  $region1: #{tpu_custom_call.1} parent=0
    #allocation2 [shape = 'u8[4096]{0}', space=vmem, size = 0x1000, scoped, tag = 'output window, operand 0, single buffered']
    #allocation3 [shape = 's32[1]{0}', space=sflag, size = 0x4, scoped, tag = 'scoped memory for tpu_custom_call.1']
    %12 = vsyncpa [#allocation3], 0
    // Predicated region
    $region2: #{tpu_custom_call.1} parent=1 // pred_check
      _
    $region3: #{tpu_custom_call.1} parent=1 // pred_check_branch
      %14 = sbr.rel (0) target = $region5
    $region4: #{tpu_custom_call.1} parent=1 // pred_region
      _
    $region5: #{tpu_custom_call.1} parent=1 // pred_fallthru
      _
    // Predicated region
    $region6: #{tpu_custom_call.1} parent=1 // pred_check
      _
    $region7: #{tpu_custom_call.1} parent=1 // pred_check_branch
      %16 = sbr.rel (0) target = $region9
    $region8: #{tpu_custom_call.1} parent=1 // pred_region
      _
    $region9: #{tpu_custom_call.1} parent=1 // pred_fallthru
      _
    // Predicated region
    $region10: #{tpu_custom_call.1} parent=1 // pred_check
      _
    $region11: #{tpu_custom_call.1} parent=1 // pred_check_branch
      %18 = sbr.rel (0) target = $region13
    $region12: #{tpu_custom_call.1} parent=1 // pred_region
      _
    $region13: #{tpu_custom_call.1} parent=1 // pred_fallthru
      _
    // Predicated region
    $region14: #{tpu_custom_call.1} parent=1 // pred_check
      _
    $region15: #{tpu_custom_call.1} parent=1 // pred_check_branch
      %20 = sbr.rel (0) target = $region17
    $region16: #{tpu_custom_call.1} parent=1 // pred_region
      _
    $region17: #{tpu_custom_call.1} parent=1 // pred_fallthru
      _
    // Predicated region
    $region18: #{tpu_custom_call.1} parent=1 // pred_check
      _
    $region19: #{tpu_custom_call.1} parent=1 // pred_check_branch
      %22 = sbr.rel (0) target = $region21
    $region20: #{tpu_custom_call.1} parent=1 // pred_region
      _
    $region21: #{tpu_custom_call.1} parent=1 // pred_fallthru
      _
    // Predicated region
    $region22: #{tpu_custom_call.1} parent=1 // pred_check
      _
    $region23: #{tpu_custom_call.1} parent=1 // pred_check_branch
      %24 = sbr.rel (0) target = $region25
    $region24: #{tpu_custom_call.1} parent=1 // pred_region
      _
    $region25: #{tpu_custom_call.1} parent=1 // pred_fallthru
      _
    // Predicated region
    $region26: #{tpu_custom_call.1} parent=1 // pred_check
      _
    $region27: #{tpu_custom_call.1} parent=1 // pred_check_branch
      %26 = sbr.rel (0) target = $region29
    $region28: #{tpu_custom_call.1} parent=1 // pred_region
      _
    $region29: #{tpu_custom_call.1} parent=1 // pred_fallthru
      _
    %v28 = vld [vmem:[%s0] sm:$0xf]
    %v29 = vld [vmem:[%s0 + $0x4] sm:$0xf]
    %v30 = vld [vmem:[%s1] sm:$0xf]
    %v31 = vld [vmem:[%s1 + $0x4] sm:$0xf]
    %v32 = vld [vmem:[%s1 + $0x8] sm:$0xf]
    %v33 = vld [vmem:[%s1 + $0xc] sm:$0xf]
    %v34 = vld [vmem:[%s2] sm:$0x1]
    %v36 = vlaneseq
    %v37 = vshrl.u32 %v36, 7
    %v38 = vsub.s32 0, %v37
    %v39 = vrot.slane %v34, %v38
    %v43 = vunpack.c.l.b16 %v28
    %v44 = vunpack.c.l.b16 %v29
    %v45 = vpack.c.b16 %v44, %v43
    %v50 = vunpack.c.l.b16 %v30
    %v51 = vunpack.c.l.b16 %v31
    %v52 = vunpack.c.l.b16 %v32
    %v53 = vunpack.c.l.b16 %v33
    %v54 = vpack.c.b16 %v51, %v50
    %v55 = vpack.c.b16 %v53, %v52
    %vm58 = vcmask 261120
    %v60 = vsel %vm58, %v45, 0
    %62 = vmatprep.subr.bf16.mxu0 0
    %63 = vmatpush1.bf16.msra.mxu0 0
    %64 = vmatprep.subr.bf16.mxu0 0
    %65 = vmatpush1.bf16.msra.mxu0 0
    %66 = vmatprep.subr.bf16.mxu0 0
    %67 = vmatpush1.bf16.msra.mxu0 0
    %68 = vmatprep.subr.bf16.mxu0 0
    %69 = vmatpush1.bf16.msra.mxu0 0
    %70 = vmatprep.subr.bf16.mxu0 0
    %71 = vmatpush1.bf16.msra.mxu0 0
    %72 = vmatprep.subr.bf16.mxu0 0
    %73 = vmatpush1.bf16.msra.mxu0 0
    %74 = vmatprep.subr.bf16.mxu0 0
    %75 = vmatpush1.bf16.msra.mxu0 %v55
    %76 = vmatprep.subr.bf16.mxu0 0
    %77 = vmatpush1.bf16.msra.mxu0 %v54
    %78 = vmatprep.subr.bf16.mxu0 0
    %79 = vmatpush2.bf16.msra.mxu0 0
    %80 = vmatprep.subr.bf16.mxu0 0
    %81 = vmatpush2.bf16.msra.mxu0 0
    %82 = vmatprep.subr.bf16.mxu0 0
    %83 = vmatpush2.bf16.msra.mxu0 0
    %84 = vmatprep.subr.bf16.mxu0 0
    %85 = vmatpush2.bf16.msra.mxu0 0
    %86 = vmatprep.subr.bf16.mxu0 0
    %87 = vmatpush2.bf16.msra.mxu0 0
    %88 = vmatprep.subr.bf16.mxu0 0
    %89 = vmatpush2.bf16.msra.mxu0 0
    %90 = vmatprep.subr.bf16.mxu0 0
    %91 = vmatpush2.bf16.msra.mxu0 0
    %92 = vmatprep.subr.bf16.mxu0 0
    %93 = vmatpush2.bf16.msra.mxu0 0
    %94 = vmatprep.mubr.bf16.mxu0 0
    %95 = vmatmul.mubr.bf16.gmra.mxu0 %v60
    %v96 = vpop.f32.mrf.mxu0
    %v97 = vadd.f32 %v39, %v96
    %v98 = vpop.f32.mrf.mxu0
    %v99 = vpop.f32.mrf.mxu0
    %v100 = vadd.f32 %v39, %v99
    %v101 = vpop.f32.mrf.mxu0
    %102 = vdwg.mxu0
    %v103 = vld [vmem:[%s3] sm:$0xf]
    %v104 = vld [vmem:[%s3 + $0x4] sm:$0xf]
    %v105 = vld [vmem:[%s3 + $0x8] sm:$0xf]
    %v106 = vld [vmem:[%s3 + $0xc] sm:$0xf]
    %v107 = vld [vmem:[%s4] sm:$0x1]
    %v109 = vlaneseq
    %v110 = vshrl.u32 %v109, 7
    %v111 = vsub.s32 0, %v110
    %v112 = vrot.slane %v107, %v111
    %v118 = vunpack.c.l.b16 %v103
    %v119 = vunpack.c.l.b16 %v104
    %v120 = vunpack.c.l.b16 %v105
    %v121 = vunpack.c.l.b16 %v106
    %v122 = vpack.c.b16 %v119, %v118
    %v123 = vpack.c.b16 %v121, %v120
    %126 = vmatprep.subr.bf16.mxu0 0
    %127 = vmatpush1.bf16.msra.mxu0 0
    %128 = vmatprep.subr.bf16.mxu0 0
    %129 = vmatpush1.bf16.msra.mxu0 0
    %130 = vmatprep.subr.bf16.mxu0 0
    %131 = vmatpush1.bf16.msra.mxu0 0
    %132 = vmatprep.subr.bf16.mxu0 0
    %133 = vmatpush1.bf16.msra.mxu0 0
    %134 = vmatprep.subr.bf16.mxu0 0
    %135 = vmatpush1.bf16.msra.mxu0 0
    %136 = vmatprep.subr.bf16.mxu0 0
    %137 = vmatpush1.bf16.msra.mxu0 0
    %138 = vmatprep.subr.bf16.mxu0 0
    %139 = vmatpush1.bf16.msra.mxu0 %v123
    %140 = vmatprep.subr.bf16.mxu0 0
    %141 = vmatpush1.bf16.msra.mxu0 %v122
    %142 = vmatprep.subr.bf16.mxu0 0
    %143 = vmatpush2.bf16.msra.mxu0 0
    %144 = vmatprep.subr.bf16.mxu0 0
    %145 = vmatpush2.bf16.msra.mxu0 0
    %146 = vmatprep.subr.bf16.mxu0 0
    %147 = vmatpush2.bf16.msra.mxu0 0
    %148 = vmatprep.subr.bf16.mxu0 0
    %149 = vmatpush2.bf16.msra.mxu0 0
    %150 = vmatprep.subr.bf16.mxu0 0
    %151 = vmatpush2.bf16.msra.mxu0 0
    %152 = vmatprep.subr.bf16.mxu0 0
    %153 = vmatpush2.bf16.msra.mxu0 0
    %154 = vmatprep.subr.bf16.mxu0 0
    %155 = vmatpush2.bf16.msra.mxu0 0
    %156 = vmatprep.subr.bf16.mxu0 0
    %157 = vmatpush2.bf16.msra.mxu0 0
    %158 = vmatprep.mubr.bf16.mxu0 0
    %159 = vmatmul.mubr.bf16.gmra.mxu0 %v60
    %v160 = vpop.f32.mrf.mxu0
    %v161 = vadd.f32 %v112, %v160
    %v162 = vpop.f32.mrf.mxu0
    %v163 = vpop.f32.mrf.mxu0
    %v164 = vadd.f32 %v112, %v163
    %v165 = vpop.f32.mrf.mxu0
    %166 = vdwg.mxu0
    %v167 = vxor.u32 %v97, 2147483648
    %v168 = vxor.u32 %v100, 2147483648
    %v169 = vmul.f32 %v167, 1.442695
    %v170 = vpow.pop %v169
    %v171 = vmul.f32 %v168, 1.442695
    %v172 = vpow.pop %v171
    %v173 = vadd.f32 %v170, 1.0
    %v174 = vadd.f32 %v172, 1.0
    %v175 = vrcp.pop %v173
    %v176 = vmul.f32 1.0, %v175
    %v177 = vrcp.pop %v174
    %v178 = vmul.f32 1.0, %v177
    %v179 = vmul.f32 %v97, %v176
    %v180 = vmul.f32 %v100, %v178
    %v181 = vmul.f32 %v179, %v161
    %v182 = vmul.f32 %v180, %v164
    %v183 = vpack.c.bf16 %v182, %v181
    %v184 = vld [vmem:[%s5] sm:$0xf]
    %v185 = vld [vmem:[%s5 + $0x4] sm:$0xf]
    %v186 = vld [vmem:[%s5 + $0x8] sm:$0xf]
    %v187 = vld [vmem:[%s5 + $0xc] sm:$0xf]
    %v188 = vld [vmem:[%s5 + $0x10] sm:$0xf]
    %v189 = vld [vmem:[%s5 + $0x14] sm:$0xf]
    %v190 = vld [vmem:[%s5 + $0x18] sm:$0xf]
    %v191 = vld [vmem:[%s5 + $0x1c] sm:$0xf]
    %v192 = vld [vmem:[%s6] sm:$0x1]
    %v194 = vlaneseq
    %v195 = vshrl.u32 %v194, 7
    %v196 = vsub.s32 0, %v195
    %v197 = vrot.slane %v192, %v196
    %v207 = vunpack.c.l.b16 %v184
    %v208 = vunpack.c.l.b16 %v185
    %v209 = vunpack.c.l.b16 %v186
    %v210 = vunpack.c.l.b16 %v187
    %v211 = vunpack.c.l.b16 %v188
    %v212 = vunpack.c.l.b16 %v189
    %v213 = vunpack.c.l.b16 %v190
    %v214 = vunpack.c.l.b16 %v191
    %v215 = vpack.c.b16 %v208, %v207
    %v216 = vpack.c.b16 %v210, %v209
    %v217 = vpack.c.b16 %v212, %v211
    %v218 = vpack.c.b16 %v214, %v213
    %vm223 = vcmask 523264
    %v225 = vsel %vm223, %v183, 0
    %227 = vmatprep.subr.bf16.mxu0 0
    %228 = vmatpush1.bf16.msra.mxu0 0
    %229 = vmatprep.subr.bf16.mxu0 0
    %230 = vmatpush1.bf16.msra.mxu0 0
    %231 = vmatprep.subr.bf16.mxu0 0
    %232 = vmatpush1.bf16.msra.mxu0 0
    %233 = vmatprep.subr.bf16.mxu0 0
    %234 = vmatpush1.bf16.msra.mxu0 0
    %235 = vmatprep.subr.bf16.mxu0 0
    %236 = vmatpush1.bf16.msra.mxu0 %v218
    %237 = vmatprep.subr.bf16.mxu0 0
    %238 = vmatpush1.bf16.msra.mxu0 %v217
    %239 = vmatprep.subr.bf16.mxu0 0
    %240 = vmatpush1.bf16.msra.mxu0 %v216
    %241 = vmatprep.subr.bf16.mxu0 0
    %242 = vmatpush1.bf16.msra.mxu0 %v215
    %243 = vmatprep.subr.bf16.mxu0 0
    %244 = vmatpush2.bf16.msra.mxu0 0
    %245 = vmatprep.subr.bf16.mxu0 0
    %246 = vmatpush2.bf16.msra.mxu0 0
    %247 = vmatprep.subr.bf16.mxu0 0
    %248 = vmatpush2.bf16.msra.mxu0 0
    %249 = vmatprep.subr.bf16.mxu0 0
    %250 = vmatpush2.bf16.msra.mxu0 0
    %251 = vmatprep.subr.bf16.mxu0 0
    %252 = vmatpush2.bf16.msra.mxu0 0
    %253 = vmatprep.subr.bf16.mxu0 0
    %254 = vmatpush2.bf16.msra.mxu0 0
    %255 = vmatprep.subr.bf16.mxu0 0
    %256 = vmatpush2.bf16.msra.mxu0 0
    %257 = vmatprep.subr.bf16.mxu0 0
    %258 = vmatpush2.bf16.msra.mxu0 0
    %259 = vmatprep.mubr.bf16.mxu0 0
    %260 = vmatmul.mubr.bf16.gmra.mxu0 %v225
    %v261 = vpop.f32.mrf.mxu0
    %v262 = vadd.f32 %v197, %v261
    %v263 = vpop.f32.mrf.mxu0
    %v264 = vpop.f32.mrf.mxu0
    %v265 = vadd.f32 %v197, %v264
    %v266 = vpop.f32.mrf.mxu0
    %267 = vdwg.mxu0
    %v268 = vunpack.c.l.bf16 %v28
    %v269 = vunpack.c.l.bf16 %v29
    %v270 = vadd.f32 %v268, %v262
    %v271 = vadd.f32 %v269, %v265
    %v272 = vpack.c.bf16 %v271, %v270
    %v274 = vunpack.c.l.b16 %v272
    %v275 = vunpack.c.h.b16 %v272
    %v276 = vpack.c.b16 %v274, %v274
    %v277 = vpack.c.b16 %v275, %v275
    %vm280 = vcmask 257024
    %281 = vst.msk [vmem:[#allocation2] sm:$0xf] %vm280, %v276
    %282 = vst.msk [vmem:[#allocation2 + $0x4] sm:$0xf] %vm280, %v277
    // Predicated region
    $region30: #{tpu_custom_call.1} parent=1 // pred_check
      _
    $region31: #{tpu_custom_call.1} parent=1 // pred_check_branch
      %284 = sbr.rel (0) target = $region33
    $region32: #{tpu_custom_call.1} parent=1 // pred_region
      %s286 = ssub.s32 128, 128
      %287 = vsyncadd [#allocation3], %s286
      %s288 = sshll.u32 [#allocation2], 4
      %s289 = int_to_ptr.vmem [resolvable:$true] %s288
      %294 = dma.vmem_to_hbm [thread:$0]  %s289, 128, %s7, [#allocation3], 64, 64, 4
    $region33: #{tpu_custom_call.1} parent=1 // pred_fallthru
      _
    // Predicated region
    $region34: #{tpu_custom_call.1} parent=1 // pred_check
      _
    $region35: #{tpu_custom_call.1} parent=1 // pred_check_branch
      %296 = sbr.rel (0) target = $region37
    $region36: #{tpu_custom_call.1} parent=1 // pred_region
      %297 = dma.done [#allocation3], 128
    $region37: #{tpu_custom_call.1} parent=1 // pred_fallthru
      _
    %298 = vsyncpa [#allocation3], 1

// kernel: tpu_custom_call.1
$region0: #{tpu_custom_call.1}
  #allocation0 [shape = 'u32[]', space=smem, size = 0x4, offset = 0x4, fixed_abs, tag = 'smem constant byte address 0x4 - core index']
  #allocation1 [shape = 'u32[144,128]{1,0:T(1,128)}', space=vmem, size = 0x12000, scoped, tag = 'internal scratch']
  %s0 = inlined_call_operand.vmem [shape: bf16[16,32], index: 0, kind: input, shape index: {}]
  %s1 = inlined_call_operand.vmem [shape: bf16[32,64], index: 1, kind: input, shape index: {}]
  %s2 = inlined_call_operand.vmem [shape: f32[1,64], index: 2, kind: input, shape index: {}]
  %s3 = inlined_call_operand.vmem [shape: bf16[32,64], index: 3, kind: input, shape index: {}]
  %s4 = inlined_call_operand.vmem [shape: f32[1,64], index: 4, kind: input, shape index: {}]
  %s5 = inlined_call_operand.vmem [shape: bf16[64,32], index: 5, kind: input, shape index: {}]
  %s6 = inlined_call_operand.vmem [shape: f32[1,32], index: 6, kind: input, shape index: {}]
  %s7 = inlined_call_operand.hbm [shape: bf16[16,32], index: 7, kind: output, shape index: {}]
  %s8 = sld [smem:[#allocation0]]
  $region38: #{tpu_custom_call.1} parent=0
    _
  %s10 = ssub.s32 1, %s8
  %s11 = scalar_select 0, %s10, %s8
  $region1: #{tpu_custom_call.1} parent=0
    #allocation2 [shape = 'u8[4096]{0}', space=vmem, size = 0x1000, scoped, tag = 'output window, operand 0, single buffered']
    #allocation3 [shape = 's32[1]{0}', space=sflag, size = 0x4, scoped, tag = 'scoped memory for tpu_custom_call.1']
    %12 = vsyncpa [#allocation3], 0
    // Predicated region
    $region2: #{tpu_custom_call.1} parent=1 // pred_check
      _
    $region3: #{tpu_custom_call.1} parent=1 // pred_check_branch
      %14 = sbr.rel (0) target = $region5
    $region4: #{tpu_custom_call.1} parent=1 // pred_region
      _
    $region5: #{tpu_custom_call.1} parent=1 // pred_fallthru
      _
    // Predicated region
    $region6: #{tpu_custom_call.1} parent=1 // pred_check
      _
    $region7: #{tpu_custom_call.1} parent=1 // pred_check_branch
      %16 = sbr.rel (0) target = $region9
    $region8: #{tpu_custom_call.1} parent=1 // pred_region
      _
    $region9: #{tpu_custom_call.1} parent=1 // pred_fallthru
      _
    // Predicated region
    $region10: #{tpu_custom_call.1} parent=1 // pred_check
      _
    $region11: #{tpu_custom_call.1} parent=1 // pred_check_branch
      %18 = sbr.rel (0) target = $region13
    $region12: #{tpu_custom_call.1} parent=1 // pred_region
      _
    $region13: #{tpu_custom_call.1} parent=1 // pred_fallthru
      _
    // Predicated region
    $region14: #{tpu_custom_call.1} parent=1 // pred_check
      _
    $region15: #{tpu_custom_call.1} parent=1 // pred_check_branch
      %20 = sbr.rel (0) target = $region17
    $region16: #{tpu_custom_call.1} parent=1 // pred_region
      _
    $region17: #{tpu_custom_call.1} parent=1 // pred_fallthru
      _
    // Predicated region
    $region18: #{tpu_custom_call.1} parent=1 // pred_check
      _
    $region19: #{tpu_custom_call.1} parent=1 // pred_check_branch
      %22 = sbr.rel (0) target = $region21
    $region20: #{tpu_custom_call.1} parent=1 // pred_region
      _
    $region21: #{tpu_custom_call.1} parent=1 // pred_fallthru
      _
    // Predicated region
    $region22: #{tpu_custom_call.1} parent=1 // pred_check
      _
    $region23: #{tpu_custom_call.1} parent=1 // pred_check_branch
      %24 = sbr.rel (0) target = $region25
    $region24: #{tpu_custom_call.1} parent=1 // pred_region
      _
    $region25: #{tpu_custom_call.1} parent=1 // pred_fallthru
      _
    // Predicated region
    $region26: #{tpu_custom_call.1} parent=1 // pred_check
      _
    $region27: #{tpu_custom_call.1} parent=1 // pred_check_branch
      %26 = sbr.rel (0) target = $region29
    $region28: #{tpu_custom_call.1} parent=1 // pred_region
      _
    $region29: #{tpu_custom_call.1} parent=1 // pred_fallthru
      _
    %v28 = vld [vmem:[%s0] sm:$0xf]
    %v29 = vld [vmem:[%s0 + $0x4] sm:$0xf]
    %v30 = vld [vmem:[%s1] sm:$0xf]
    %v31 = vld [vmem:[%s1 + $0x4] sm:$0xf]
    %v32 = vld [vmem:[%s1 + $0x8] sm:$0xf]
    %v33 = vld [vmem:[%s1 + $0xc] sm:$0xf]
    %v34 = vld [vmem:[%s2] sm:$0x1]
    %v36 = vlaneseq
    %v37 = vshrl.u32 %v36, 7
    %v38 = vsub.s32 0, %v37
    %v39 = vrot.slane %v34, %v38
    %v43 = vunpack.c.l.b16 %v28
    %v44 = vunpack.c.l.b16 %v29
    %v45 = vpack.c.b16 %v44, %v43
    %v50 = vunpack.c.l.b16 %v30
    %v51 = vunpack.c.l.b16 %v31
    %v52 = vunpack.c.l.b16 %v32
    %v53 = vunpack.c.l.b16 %v33
    %v54 = vpack.c.b16 %v51, %v50
    %v55 = vpack.c.b16 %v53, %v52
    %vm58 = vcmask 261120
    %v60 = vsel %vm58, %v45, 0
    %62 = vmatprep.subr.bf16.mxu0 0
    %63 = vmatpush1.bf16.msra.mxu0 0
    %64 = vmatprep.subr.bf16.mxu0 0
    %65 = vmatpush1.bf16.msra.mxu0 0
    %66 = vmatprep.subr.bf16.mxu0 0
    %67 = vmatpush1.bf16.msra.mxu0 0
    %68 = vmatprep.subr.bf16.mxu0 0
    %69 = vmatpush1.bf16.msra.mxu0 0
    %70 = vmatprep.subr.bf16.mxu0 0
    %71 = vmatpush1.bf16.msra.mxu0 0
    %72 = vmatprep.subr.bf16.mxu0 0
    %73 = vmatpush1.bf16.msra.mxu0 0
    %74 = vmatprep.subr.bf16.mxu0 0
    %75 = vmatpush1.bf16.msra.mxu0 %v55
    %76 = vmatprep.subr.bf16.mxu0 0
    %77 = vmatpush1.bf16.msra.mxu0 %v54
    %78 = vmatprep.subr.bf16.mxu0 0
    %79 = vmatpush2.bf16.msra.mxu0 0
    %80 = vmatprep.subr.bf16.mxu0 0
    %81 = vmatpush2.bf16.msra.mxu0 0
    %82 = vmatprep.subr.bf16.mxu0 0
    %83 = vmatpush2.bf16.msra.mxu0 0
    %84 = vmatprep.subr.bf16.mxu0 0
    %85 = vmatpush2.bf16.msra.mxu0 0
    %86 = vmatprep.subr.bf16.mxu0 0
    %87 = vmatpush2.bf16.msra.mxu0 0
    %88 = vmatprep.subr.bf16.mxu0 0
    %89 = vmatpush2.bf16.msra.mxu0 0
    %90 = vmatprep.subr.bf16.mxu0 0
    %91 = vmatpush2.bf16.msra.mxu0 0
    %92 = vmatprep.subr.bf16.mxu0 0
    %93 = vmatpush2.bf16.msra.mxu0 0
    %94 = vmatprep.mubr.bf16.mxu0 0
    %95 = vmatmul.mubr.bf16.gmra.mxu0 %v60
    %v96 = vpop.f32.mrf.mxu0
    %v97 = vadd.f32 %v39, %v96
    %v98 = vpop.f32.mrf.mxu0
    %v99 = vpop.f32.mrf.mxu0
    %v100 = vadd.f32 %v39, %v99
    %v101 = vpop.f32.mrf.mxu0
    %102 = vdwg.mxu0
    %v103 = vld [vmem:[%s3] sm:$0xf]
    %v104 = vld [vmem:[%s3 + $0x4] sm:$0xf]
    %v105 = vld [vmem:[%s3 + $0x8] sm:$0xf]
    %v106 = vld [vmem:[%s3 + $0xc] sm:$0xf]
    %v107 = vld [vmem:[%s4] sm:$0x1]
    %v109 = vlaneseq
    %v110 = vshrl.u32 %v109, 7
    %v111 = vsub.s32 0, %v110
    %v112 = vrot.slane %v107, %v111
    %v118 = vunpack.c.l.b16 %v103
    %v119 = vunpack.c.l.b16 %v104
    %v120 = vunpack.c.l.b16 %v105
    %v121 = vunpack.c.l.b16 %v106
    %v122 = vpack.c.b16 %v119, %v118
    %v123 = vpack.c.b16 %v121, %v120
    %126 = vmatprep.subr.bf16.mxu0 0
    %127 = vmatpush1.bf16.msra.mxu0 0
    %128 = vmatprep.subr.bf16.mxu0 0
    %129 = vmatpush1.bf16.msra.mxu0 0
    %130 = vmatprep.subr.bf16.mxu0 0
    %131 = vmatpush1.bf16.msra.mxu0 0
    %132 = vmatprep.subr.bf16.mxu0 0
    %133 = vmatpush1.bf16.msra.mxu0 0
    %134 = vmatprep.subr.bf16.mxu0 0
    %135 = vmatpush1.bf16.msra.mxu0 0
    %136 = vmatprep.subr.bf16.mxu0 0
    %137 = vmatpush1.bf16.msra.mxu0 0
    %138 = vmatprep.subr.bf16.mxu0 0
    %139 = vmatpush1.bf16.msra.mxu0 %v123
    %140 = vmatprep.subr.bf16.mxu0 0
    %141 = vmatpush1.bf16.msra.mxu0 %v122
    %142 = vmatprep.subr.bf16.mxu0 0
    %143 = vmatpush2.bf16.msra.mxu0 0
    %144 = vmatprep.subr.bf16.mxu0 0
    %145 = vmatpush2.bf16.msra.mxu0 0
    %146 = vmatprep.subr.bf16.mxu0 0
    %147 = vmatpush2.bf16.msra.mxu0 0
    %148 = vmatprep.subr.bf16.mxu0 0
    %149 = vmatpush2.bf16.msra.mxu0 0
    %150 = vmatprep.subr.bf16.mxu0 0
    %151 = vmatpush2.bf16.msra.mxu0 0
    %152 = vmatprep.subr.bf16.mxu0 0
    %153 = vmatpush2.bf16.msra.mxu0 0
    %154 = vmatprep.subr.bf16.mxu0 0
    %155 = vmatpush2.bf16.msra.mxu0 0
    %156 = vmatprep.subr.bf16.mxu0 0
    %157 = vmatpush2.bf16.msra.mxu0 0
    %158 = vmatprep.mubr.bf16.mxu0 0
    %159 = vmatmul.mubr.bf16.gmra.mxu0 %v60
    %v160 = vpop.f32.mrf.mxu0
    %v161 = vadd.f32 %v112, %v160
    %v162 = vpop.f32.mrf.mxu0
    %v163 = vpop.f32.mrf.mxu0
    %v164 = vadd.f32 %v112, %v163
    %v165 = vpop.f32.mrf.mxu0
    %166 = vdwg.mxu0
    %v167 = vxor.u32 %v97, 2147483648
    %v168 = vxor.u32 %v100, 2147483648
    %v169 = vmul.f32 %v167, 1.442695
    %v170 = vpow.pop %v169
    %v171 = vmul.f32 %v168, 1.442695
    %v172 = vpow.pop %v171
    %v173 = vadd.f32 %v170, 1.0
    %v174 = vadd.f32 %v172, 1.0
    %v175 = vrcp.pop %v173
    %v176 = vmul.f32 1.0, %v175
    %v177 = vrcp.pop %v174
    %v178 = vmul.f32 1.0, %v177
    %v179 = vmul.f32 %v97, %v176
    %v180 = vmul.f32 %v100, %v178
    %v181 = vmul.f32 %v179, %v161
    %v182 = vmul.f32 %v180, %v164
    %v183 = vpack.c.bf16 %v182, %v181
    %v184 = vld [vmem:[%s5] sm:$0xf]
    %v185 = vld [vmem:[%s5 + $0x4] sm:$0xf]
    %v186 = vld [vmem:[%s5 + $0x8] sm:$0xf]
    %v187 = vld [vmem:[%s5 + $0xc] sm:$0xf]
    %v188 = vld [vmem:[%s5 + $0x10] sm:$0xf]
    %v189 = vld [vmem:[%s5 + $0x14] sm:$0xf]
    %v190 = vld [vmem:[%s5 + $0x18] sm:$0xf]
    %v191 = vld [vmem:[%s5 + $0x1c] sm:$0xf]
    %v192 = vld [vmem:[%s6] sm:$0x1]
    %v194 = vlaneseq
    %v195 = vshrl.u32 %v194, 7
    %v196 = vsub.s32 0, %v195
    %v197 = vrot.slane %v192, %v196
    %v207 = vunpack.c.l.b16 %v184
    %v208 = vunpack.c.l.b16 %v185
    %v209 = vunpack.c.l.b16 %v186
    %v210 = vunpack.c.l.b16 %v187
    %v211 = vunpack.c.l.b16 %v188
    %v212 = vunpack.c.l.b16 %v189
    %v213 = vunpack.c.l.b16 %v190
    %v214 = vunpack.c.l.b16 %v191
    %v215 = vpack.c.b16 %v208, %v207
    %v216 = vpack.c.b16 %v210, %v209
    %v217 = vpack.c.b16 %v212, %v211
    %v218 = vpack.c.b16 %v214, %v213
    %vm223 = vcmask 523264
    %v225 = vsel %vm223, %v183, 0
    %227 = vmatprep.subr.bf16.mxu0 0
    %228 = vmatpush1.bf16.msra.mxu0 0
    %229 = vmatprep.subr.bf16.mxu0 0
    %230 = vmatpush1.bf16.msra.mxu0 0
    %231 = vmatprep.subr.bf16.mxu0 0
    %232 = vmatpush1.bf16.msra.mxu0 0
    %233 = vmatprep.subr.bf16.mxu0 0
    %234 = vmatpush1.bf16.msra.mxu0 0
    %235 = vmatprep.subr.bf16.mxu0 0
    %236 = vmatpush1.bf16.msra.mxu0 %v218
    %237 = vmatprep.subr.bf16.mxu0 0
    %238 = vmatpush1.bf16.msra.mxu0 %v217
    %239 = vmatprep.subr.bf16.mxu0 0
    %240 = vmatpush1.bf16.msra.mxu0 %v216
    %241 = vmatprep.subr.bf16.mxu0 0
    %242 = vmatpush1.bf16.msra.mxu0 %v215
    %243 = vmatprep.subr.bf16.mxu0 0
    %244 = vmatpush2.bf16.msra.mxu0 0
    %245 = vmatprep.subr.bf16.mxu0 0
    %246 = vmatpush2.bf16.msra.mxu0 0
    %247 = vmatprep.subr.bf16.mxu0 0
    %248 = vmatpush2.bf16.msra.mxu0 0
    %249 = vmatprep.subr.bf16.mxu0 0
    %250 = vmatpush2.bf16.msra.mxu0 0
    %251 = vmatprep.subr.bf16.mxu0 0
    %252 = vmatpush2.bf16.msra.mxu0 0
    %253 = vmatprep.subr.bf16.mxu0 0
    %254 = vmatpush2.bf16.msra.mxu0 0
    %255 = vmatprep.subr.bf16.mxu0 0
    %256 = vmatpush2.bf16.msra.mxu0 0
    %257 = vmatprep.subr.bf16.mxu0 0
    %258 = vmatpush2.bf16.msra.mxu0 0
    %259 = vmatprep.mubr.bf16.mxu0 0
    %260 = vmatmul.mubr.bf16.gmra.mxu0 %v225
    %v261 = vpop.f32.mrf.mxu0
    %v262 = vadd.f32 %v197, %v261
    %v263 = vpop.f32.mrf.mxu0
    %v264 = vpop.f32.mrf.mxu0
    %v265 = vadd.f32 %v197, %v264
    %v266 = vpop.f32.mrf.mxu0
    %267 = vdwg.mxu0
    %v268 = vunpack.c.l.bf16 %v28
    %v269 = vunpack.c.l.bf16 %v29
    %v270 = vadd.f32 %v268, %v262
    %v271 = vadd.f32 %v269, %v265
    %v272 = vpack.c.bf16 %v271, %v270
    %v274 = vunpack.c.l.b16 %v272
    %v275 = vunpack.c.h.b16 %v272
    %v276 = vpack.c.b16 %v274, %v274
    %v277 = vpack.c.b16 %v275, %v275
    %vm280 = vcmask 257024
    %281 = vst.msk [vmem:[#allocation2] sm:$0xf] %vm280, %v276
    %282 = vst.msk [vmem:[#allocation2 + $0x4] sm:$0xf] %vm280, %v277
    // Predicated region
    $region30: #{tpu_custom_call.1} parent=1 // pred_check
      _
    $region31: #{tpu_custom_call.1} parent=1 // pred_check_branch
      %284 = sbr.rel (0) target = $region33
    $region32: #{tpu_custom_call.1} parent=1 // pred_region
      %s286 = ssub.s32 128, 128
      %287 = vsyncadd [#allocation3], %s286
      %s288 = sshll.u32 [#allocation2], 4
      %s289 = int_to_ptr.vmem [resolvable:$true] %s288
      %294 = dma.vmem_to_hbm [thread:$0]  %s289, 128, %s7, [#allocation3], 64, 64, 4
    $region33: #{tpu_custom_call.1} parent=1 // pred_fallthru
      _
    // Predicated region
    $region34: #{tpu_custom_call.1} parent=1 // pred_check
      _
    $region35: #{tpu_custom_call.1} parent=1 // pred_check_branch
      %296 = sbr.rel (0) target = $region37
    $region36: #{tpu_custom_call.1} parent=1 // pred_region
      %297 = dma.done [#allocation3], 128
    $region37: #{tpu_custom_call.1} parent=1 // pred_fallthru
      _
    %298 = vsyncpa [#allocation3], 1

</llo_original>
